<compile_context>
chip_gen: v7x
topology: tpu7x:2x2x1
jax: 0.10.0
libtpu: 0.0.40
codegen_flags: <defaults>
</compile_context>

<pallas_src>
import functools

import jax
import jax.numpy as jnp
from jax import lax
from jax.experimental import pallas as pl
from jax.experimental.pallas import tpu as pltpu


def _label_smooth_kernel(x_ref, t_ref, out_ref, *, smoothing, n_total,
                         block_rows):
    x = x_ref[...].astype(jnp.float32)                        # (bn, C) f32
    c = x.shape[-1]

    # Shifted-logit statistics (numerically robust): s <= 0, lse_m <= log C.
    m = jnp.max(x, axis=-1, keepdims=True)                    # (bn, 1)
    s = x - m                                                 # (bn, C)
    sum_exp = jnp.sum(jnp.exp(s), axis=-1, keepdims=True)     # (bn, 1)
    lse_m = jnp.log(sum_exp)                                  # lse - m
    sum_s = jnp.sum(s, axis=-1, keepdims=True)                # sum_x - C*m

    # Fused in-kernel gather of the target logit (shifted): one-hot select +
    # lane reduction over the already-resident tile; no extra HBM pass over x.
    tgt = t_ref[...]                                          # (bn, 1) int32
    lane = lax.broadcasted_iota(jnp.int32, s.shape, 1)        # (bn, C)
    s_t = jnp.sum(jnp.where(lane == tgt, s, 0.0), axis=-1, keepdims=True)

    off = jnp.float32(smoothing / (c - 1.0)) if c > 1 else jnp.float32(0.0)
    on_minus_off = jnp.float32(1.0 - smoothing) - off

    # loss_row = sum_c(-w_c * (x_c - lse))
    #          = off * (C*lse_m - sum_s) + (on - off) * (lse_m - s_target)
    per_row = (off * (jnp.float32(c) * lse_m - sum_s)
               + on_minus_off * (lse_m - s_t))                # (bn, 1)

    # Mask rows past N (ragged last block reads unspecified padding; select
    # drops any NaN/inf those rows produced).
    row = pl.program_id(0) * block_rows + lax.broadcasted_iota(
        jnp.int32, per_row.shape, 0)
    per_row = jnp.where(row < n_total, per_row, 0.0)

    # One aligned (8,128) f32 tile per grid step holding this block's partial
    # sum (single unmasked vreg store; keeps grid steps fully independent).
    out_ref[...] = jnp.full(out_ref.shape, jnp.sum(per_row), dtype=jnp.float32)


def _ceil_to(v, a):
    return -(-v // a) * a


def _auto_block_rows(n, c, dtype, vmem_budget_bytes=24 * 1024 * 1024,
                     max_rows=4096):
    """Rows per block, sized by the *padded* VMEM footprint of one grid step.

    Budget per row (all lane-padded to multiples of 128):
      2 x input buffers (native dtype, double buffered)
      2 x full-width f32 working tiles (upcast/shifted logits + exp temp)
      2 x int32 target buffers (double buffered, (rows, 1) pads to 128 lanes)
      8 x (rows, 1) f32 row statistics (m, lse, sums, mask, per_row, ...)
    """
    itemsize = jnp.dtype(dtype).itemsize
    align = 16 if itemsize <= 2 else 8
    c_pad = _ceil_to(c, 128)
    per_row_bytes = (2 * c_pad * itemsize      # x input (double buffered)
                     + 2 * c_pad * 4           # f32 working tiles
                     + 2 * 128 * 4             # int32 target (double buffered)
                     + 8 * 128 * 4)            # row statistics
    rows = max(1, vmem_budget_bytes // per_row_bytes)
    rows = (rows // align) * align
    rows = max(align, min(rows, max_rows))
    rows = min(rows, _ceil_to(n, align))       # don't exceed padded N
    if n > align:
        # Prefer >= 2 blocks so the "parallel" grid axis can feed both
        # TensorCores on v7x (and exercise the pipeline at all).
        half = -(-n // 2)
        rows = min(rows, max(align, _ceil_to(half, align)))
    return int(rows)


def label_smooth_loss(x, target, smoothing=0.0, block_rows=None):
    """x: (N, C) float, target: (N,) int -> scalar f32 mean smoothed loss."""
    n, c = x.shape
    if block_rows is None:
        block_rows = _auto_block_rows(n, c, x.dtype)
    num_blocks = -(-n // block_rows)

    # Targets go to the kernel as an (N, 1) int32 per-row input; the target
    # logit is gathered inside the kernel from the resident x tile.
    t2d = target.astype(jnp.int32).reshape(n, 1)

    kernel = functools.partial(
        _label_smooth_kernel,
        smoothing=float(smoothing),
        n_total=n,
        block_rows=block_rows,
    )

    partials = pl.pallas_call(
        kernel,
        out_shape=jax.ShapeDtypeStruct((num_blocks, 8, 128), jnp.float32),
        grid_spec=pltpu.PrefetchScalarGridSpec(
            num_scalar_prefetch=0,
            grid=(num_blocks,),
            in_specs=[
                pl.BlockSpec((block_rows, c), lambda i: (i, 0)),
                pl.BlockSpec((block_rows, 1), lambda i: (i, 0)),
            ],
            out_specs=pl.BlockSpec((1, 8, 128), lambda i: (i, 0, 0)),
        ),
        compiler_params=pltpu.CompilerParams(
            dimension_semantics=("parallel",),
            vmem_limit_bytes=48 * 1024 * 1024,
        ),
    )(x, t2d)

    # Scale by 1/N exactly once (better accumulation, one fewer op per step).
    return partials[:, 0, 0].sum() / jnp.float32(n)


def _reference(x, target, smoothing):
    log_prob = jax.nn.log_softmax(x.astype(jnp.float32), axis=-1)
    n, c = x.shape
    w = jnp.full((n, c), smoothing / (c - 1.0), dtype=jnp.float32)
    w = w.at[jnp.arange(n), target].set(1.0 - smoothing)
    return (-w * log_prob).sum(axis=-1).mean()


if __name__ == "__main__":
    key = jax.random.PRNGKey(0)
    k1, k2, k3, k4 = jax.random.split(key, 4)
    smoothing = 0.1

    # Case 1: small f32 problem, auto block size (2 blocks, ragged last one).
    n1, c1 = 24, 48
    x1 = jax.random.normal(k1, (n1, c1), dtype=jnp.float32)
    t1 = jax.random.randint(k2, (n1,), 0, c1, dtype=jnp.int32)
    loss1 = jax.block_until_ready(label_smooth_loss(x1, t1, smoothing))
    ref1 = _reference(x1, t1, smoothing)
    assert jnp.allclose(loss1, ref1, atol=1e-4, rtol=2e-5), (loss1, ref1)

    # Case 2: bf16 input, multiple blocks with a ragged (masked) final block.
    n2, c2 = 40, 40
    x2 = jax.random.normal(k3, (n2, c2), dtype=jnp.float32).astype(jnp.bfloat16)
    t2 = jax.random.randint(k4, (n2,), 0, c2, dtype=jnp.int32)
    loss2 = jax.block_until_ready(
        label_smooth_loss(x2, t2, smoothing, block_rows=16))
    ref2 = _reference(x2, t2, smoothing)
    assert jnp.allclose(loss2, ref2, atol=1e-4, rtol=2e-5), (loss2, ref2)

    print("KERNEL_OK")
</pallas_src>

<mosaic_0001>
module attributes {stable_mosaic.version = 11 : i64} {
  func.func @_label_smooth_kernel(%arg0: i32, %arg1: memref<16x48xf32, #tpu.memory_space<vmem>>, %arg2: memref<16x1xi32, #tpu.memory_space<vmem>>, %arg3: memref<1x8x128xf32, #tpu.memory_space<vmem>>) attributes {dimension_semantics = [#tpu.dimension_semantics<parallel>], iteration_bounds = array<i64: 2>, scalar_prefetch = 0 : i64, scratch_operands = 0 : i64, tpu.core_type = #tpu.core_type<tc>, window_params = [{transform_indices = @transform_0, window_bounds = array<i64: 16, 48>}, {transform_indices = @transform_1, window_bounds = array<i64: 16, 1>}, {transform_indices = @transform_2, window_bounds = array<i64: 1, 8, 128>}]} {
    %c0 = arith.constant 0 : index
    %c0_0 = arith.constant 0 : index
    %0 = vector.load %arg1[%c0, %c0_0] : memref<16x48xf32, #tpu.memory_space<vmem>>, vector<16x48xf32>
    %cst = arith.constant dense<0xFF800000> : vector<16xf32>
    %1 = vector.multi_reduction <maximumf>, %0, %cst [1] : vector<16x48xf32> to vector<16xf32>
    %2 = vector.shape_cast %1 : vector<16xf32> to vector<16x1xf32>
    %3 = vector.broadcast %2 : vector<16x1xf32> to vector<16x48xf32>
    %4 = arith.subf %0, %3 : vector<16x48xf32>
    %5 = math.exp %4 : vector<16x48xf32>
    %cst_1 = arith.constant dense<0.000000e+00> : vector<16xf32>
    %6 = vector.multi_reduction <add>, %5, %cst_1 [1] : vector<16x48xf32> to vector<16xf32>
    %7 = vector.shape_cast %6 : vector<16xf32> to vector<16x1xf32>
    %8 = math.log %7 : vector<16x1xf32>
    %cst_2 = arith.constant dense<0.000000e+00> : vector<16xf32>
    %9 = vector.multi_reduction <add>, %4, %cst_2 [1] : vector<16x48xf32> to vector<16xf32>
    %10 = vector.shape_cast %9 : vector<16xf32> to vector<16x1xf32>
    %c0_3 = arith.constant 0 : index
    %c0_4 = arith.constant 0 : index
    %11 = vector.load %arg2[%c0_3, %c0_4] : memref<16x1xi32, #tpu.memory_space<vmem>>, vector<16x1xi32>
    %12 = tpu.iota {dimensions = array<i32: 1>} : vector<16x48xi32>
    %13 = vector.broadcast %11 : vector<16x1xi32> to vector<16x48xi32>
    %14 = arith.cmpi eq, %12, %13 : vector<16x48xi32>
    %cst_5 = arith.constant 0.000000e+00 : f32
    %15 = vector.broadcast %cst_5 : f32 to vector<16x48xf32>
    %16 = arith.select %14, %4, %15 : vector<16x48xi1>, vector<16x48xf32>
    %cst_6 = arith.constant dense<0.000000e+00> : vector<16xf32>
    %17 = vector.multi_reduction <add>, %16, %cst_6 [1] : vector<16x48xf32> to vector<16xf32>
    %18 = vector.shape_cast %17 : vector<16xf32> to vector<16x1xf32>
    %cst_7 = arith.constant 0.899999976 : f32
    %cst_8 = arith.constant 0.00212765951 : f32
    %19 = arith.subf %cst_7, %cst_8 : f32
    %cst_9 = arith.constant 4.800000e+01 : f32
    %20 = vector.broadcast %cst_9 : f32 to vector<16x1xf32>
    %21 = arith.mulf %20, %8 : vector<16x1xf32>
    %22 = arith.subf %21, %10 : vector<16x1xf32>
    %cst_10 = arith.constant 0.00212765951 : f32
    %23 = vector.broadcast %cst_10 : f32 to vector<16x1xf32>
    %24 = arith.mulf %23, %22 : vector<16x1xf32>
    %25 = arith.subf %8, %18 : vector<16x1xf32>
    %26 = vector.broadcast %19 : f32 to vector<16x1xf32>
    %27 = arith.mulf %26, %25 : vector<16x1xf32>
    %28 = arith.addf %24, %27 : vector<16x1xf32>
    %c16_i32 = arith.constant 16 : i32
    %29 = arith.muli %arg0, %c16_i32 : i32
    %30 = tpu.iota {dimensions = array<i32: 0>} : vector<16x1xi32>
    %31 = vector.broadcast %29 : i32 to vector<16x1xi32>
    %32 = arith.addi %31, %30 : vector<16x1xi32>
    %c24_i32 = arith.constant 24 : i32
    %33 = vector.broadcast %c24_i32 : i32 to vector<16x1xi32>
    %34 = arith.cmpi slt, %32, %33 : vector<16x1xi32>
    %cst_11 = arith.constant 0.000000e+00 : f32
    %35 = vector.broadcast %cst_11 : f32 to vector<16x1xf32>
    %36 = arith.select %34, %28, %35 : vector<16x1xi1>, vector<16x1xf32>
    %37 = vector.shape_cast %36 : vector<16x1xf32> to vector<1x16x1xf32>
    %cst_12 = arith.constant dense<0.000000e+00> : vector<1xf32>
    %38 = vector.multi_reduction <add>, %37, %cst_12 [1, 2] : vector<1x16x1xf32> to vector<1xf32>
    %39 = vector.shape_cast %38 : vector<1xf32> to vector<1x1x1xf32>
    %40 = vector.extract %39[0, 0, 0] : f32 from vector<1x1x1xf32>
    %41 = vector.broadcast %40 : f32 to vector<1x8x128xf32>
    %c0_13 = arith.constant 0 : index
    %c0_14 = arith.constant 0 : index
    %c0_15 = arith.constant 0 : index
    %42 = vector.load %arg3[%c0_13, %c0_14, %c0_15] : memref<1x8x128xf32, #tpu.memory_space<vmem>>, vector<1x8x128xf32>
    tpu.vector_store %arg3[%c0_13, %c0_14, %c0_15], %41 {strides = array<i32>} : memref<1x8x128xf32, #tpu.memory_space<vmem>>, vector<1x8x128xf32>,
    return
  }
  func.func @transform_0(%arg0: i32) -> (i32, i32) {
    %c0_i32 = arith.constant 0 : i32
    %c0_i32_0 = arith.constant 0 : i32
    return %arg0, %c0_i32 : i32, i32
  }
  func.func @transform_1(%arg0: i32) -> (i32, i32) {
    %c0_i32 = arith.constant 0 : i32
    %c0_i32_0 = arith.constant 0 : i32
    return %arg0, %c0_i32 : i32, i32
  }
  func.func @transform_2(%arg0: i32) -> (i32, i32, i32) {
    %c0_i32 = arith.constant 0 : i32
    %c0_i32_0 = arith.constant 0 : i32
    %c0_i32_1 = arith.constant 0 : i32
    return %arg0, %c0_i32, %c0_i32_0 : i32, i32, i32
  }
}

</mosaic_0001>

<llo_original>
// kernel: tpu_custom_call.1
$region0: #{tpu_custom_call.1}
  #allocation0 [shape = 'u32[]', space=smem, size = 0x4, offset = 0x4, fixed_abs, tag = 'smem constant byte address 0x4 - core index']
  #allocation1 [shape = 'u32[144,128]{1,0:T(1,128)}', space=vmem, size = 0x12000, scoped, tag = 'internal scratch']
  %s0 = inlined_call_operand.vmem [shape: f32[24,48], index: 0, kind: input, shape index: {}]
  %s1 = inlined_call_operand.vmem [shape: s32[24,1], index: 1, kind: input, shape index: {}]
  %s2 = inlined_call_operand.hbm [shape: f32[2,8,128], index: 2, kind: output, shape index: {}]
  %s3 = sld [smem:[#allocation0]]
  $region41: #{tpu_custom_call.1} parent=0
    _
  %s5 = ssub.s32 1, %s3
  %s6 = scalar_select 0, %s5, %s3
  $region1: #{tpu_custom_call.1} parent=0
    #allocation2 [shape = 'u8[8192]{0}', space=vmem, size = 0x2000, scoped, tag = 'output window, operand 0']
    #allocation3 [shape = 's32[2]{0}', space=sflag, size = 0x8, scoped, tag = 'scoped memory for tpu_custom_call.1']
    %7 = vsyncpa [#allocation3], 0
    %s8 = scalar_lea.sflag [#allocation3], 1
    %9 = vsyncpa %s8, 0
    loop: start=0, step=1, limit=4
    $region2: #{tpu_custom_call.1} parent=1 // loop_pre_header
      _
    $region3: #{tpu_custom_call.1} parent=1 // loop_header
      %s11 = sphi 0, %s15
      %p12 = scmp.ge.s32.totalorder %s11, 4
      %s21 = sphi 0, %s23
      %s24 = sphi 0, %s21
      %s25 = sphi 0, %s24
      %s41 = sphi 0, %s25
      %s47 = sphi 0, %s49
      %s50 = sphi 0, %s47
      %s51 = sphi 0, %s50
      %s67 = sphi 0, %s51
      %s73 = sphi 0, %s75
      %s76 = sphi 0, %s73
      %s77 = sphi 0, %s76
      %s93 = sphi 0, %s77
    $region4: #{tpu_custom_call.1} parent=1 // loop_header_branch
      %14 = sbr.rel (%p12) target = $region8
    $region5: #{tpu_custom_call.1} parent=1 // loop_body
      %s16 = ssub.s32 %s11, 1
      %s17 = ssub.s32 %s11, 2
      %s18 = sadd.s32 %s11, 1
      %s19 = ssub.s32 %s11, %s18
      %p20 = scmp.eq.s32.totalorder %s19, 0
      %s22 = sadd.s32 %s21, 1
      %s23 = scalar_select %p20, %s21, %s22
      %p26 = pneg %p20
      %p27 = scmp.eq.s32.totalorder %s11, 1
      %p28 = por %p26, %p27
      %p29 = scmp.ne.s32.totalorder %s21, %s24
      %p30 = scmp.eq.s32.totalorder %s11, 0
      %p31 = por %p29, %p30
      %p32 = scmp.ne.s32.totalorder %s21, %s24
      %p33 = scmp.eq.s32.totalorder %s16, 1
      %p34 = por %p32, %p33
      %p35 = scmp.ne.s32.totalorder %s24, %s25
      %p36 = scmp.eq.s32.totalorder %s16, 0
      %p37 = por %p35, %p36
      %p38 = scmp.ne.s32.totalorder %s24, %s25
      %p39 = scmp.eq.s32.totalorder %s17, 1
      %p40 = por %p38, %p39
      %p42 = scmp.ne.s32.totalorder %s25, %s41
      %p43 = scmp.eq.s32.totalorder %s17, 0
      %p44 = por %p42, %p43
      %s45 = ssub.s32 %s11, %s18
      %p46 = scmp.eq.s32.totalorder %s45, 0
      %s48 = sadd.s32 %s47, 1
      %s49 = scalar_select %p46, %s47, %s48
      %p52 = pneg %p46
      %p53 = scmp.eq.s32.totalorder %s11, 1
      %p54 = por %p52, %p53
      %p55 = scmp.ne.s32.totalorder %s47, %s50
      %p56 = scmp.eq.s32.totalorder %s11, 0
      %p57 = por %p55, %p56
      %p58 = scmp.ne.s32.totalorder %s47, %s50
      %p59 = scmp.eq.s32.totalorder %s16, 1
      %p60 = por %p58, %p59
      %p61 = scmp.ne.s32.totalorder %s50, %s51
      %p62 = scmp.eq.s32.totalorder %s16, 0
      %p63 = por %p61, %p62
      %p64 = scmp.ne.s32.totalorder %s50, %s51
      %p65 = scmp.eq.s32.totalorder %s17, 1
      %p66 = por %p64, %p65
      %p68 = scmp.ne.s32.totalorder %s51, %s67
      %p69 = scmp.eq.s32.totalorder %s17, 0
      %p70 = por %p68, %p69
      %s71 = ssub.s32 %s11, %s18
      %p72 = scmp.eq.s32.totalorder %s71, 0
      %s74 = sadd.s32 %s73, 1
      %s75 = scalar_select %p72, %s73, %s74
      %p78 = pneg %p72
      %p79 = scmp.eq.s32.totalorder %s11, 1
      %p80 = por %p78, %p79
      %p81 = scmp.ne.s32.totalorder %s73, %s76
      %p82 = scmp.eq.s32.totalorder %s11, 0
      %p83 = por %p81, %p82
      %p84 = scmp.ne.s32.totalorder %s73, %s76
      %p85 = scmp.eq.s32.totalorder %s16, 1
      %p86 = por %p84, %p85
      %p87 = scmp.ne.s32.totalorder %s76, %s77
      %p88 = scmp.eq.s32.totalorder %s16, 0
      %p89 = por %p87, %p88
      %p90 = scmp.ne.s32.totalorder %s76, %s77
      %p91 = scmp.eq.s32.totalorder %s17, 1
      %p92 = por %p90, %p91
      %p94 = scmp.ne.s32.totalorder %s77, %s93
      %p95 = scmp.eq.s32.totalorder %s17, 0
      %p96 = por %p94, %p95
      %p97 = scmp.le.s32.totalorder 1, %s11
      %p98 = scmp.lt.s32.totalorder %s11, 3
      %p99 = pnand %p97, %p98
      %p100 = pneg %p99
      // Predicated region
      $region9: #{tpu_custom_call.1} parent=5 // pred_check
        _
      $region10: #{tpu_custom_call.1} parent=5 // pred_check_branch
        %102 = sbr.rel (%p99) target = $region12
      $region11: #{tpu_custom_call.1} parent=5 // pred_region
        %s103 = ssub.s32 %s11, 1
      $region12: #{tpu_custom_call.1} parent=5 // pred_fallthru
        _
      %p104 = scmp.lt.s32.totalorder %s11, 2
      // Predicated region
      $region13: #{tpu_custom_call.1} parent=5 // pred_check
        %p105 = pneg %p104
      $region14: #{tpu_custom_call.1} parent=5 // pred_check_branch
        %107 = sbr.rel (%p105) target = $region16
      $region15: #{tpu_custom_call.1} parent=5 // pred_region
        // Predicated region
        $region17: #{tpu_custom_call.1} parent=15 // pred_check
          %p108 = pneg %p31
        $region18: #{tpu_custom_call.1} parent=15 // pred_check_branch
          %110 = sbr.rel (%p108) target = $region20
        $region19: #{tpu_custom_call.1} parent=15 // pred_region
          %s111 = smul.u32 2, %s11
          %s112 = ssub.s32 3, %s111
          %p113 = scmp.lt.s32.totalorder %s112, 2
          %s114 = scalar_select %p113, %s112, 2
          %s115 = smul.u32 128, %s114
          %p116 = scmp.lt.s32.totalorder %s111, 2
          %s117 = scalar_select %p116, %s111, 2
          %s118 = smul.addr %s117, 8
          %s119 = scalar_lea.vmem %s0, %s118
          %s120 = smul.u32 2, %s11
          %s121 = ssub.s32 3, %s120
          %p122 = scmp.lt.s32.totalorder %s121, 2
          %s123 = scalar_select %p122, %s121, 2
          %s124 = smul.u32 128, %s123
        $region20: #{tpu_custom_call.1} parent=15 // pred_fallthru
          _
        // Predicated region
        $region21: #{tpu_custom_call.1} parent=15 // pred_check
          %p125 = pneg %p57
        $region22: #{tpu_custom_call.1} parent=15 // pred_check_branch
          %127 = sbr.rel (%p125) target = $region24
        $region23: #{tpu_custom_call.1} parent=15 // pred_region
          %s128 = smul.u32 2, %s11
          %s129 = ssub.s32 3, %s128
          %p130 = scmp.lt.s32.totalorder %s129, 2
          %s131 = scalar_select %p130, %s129, 2
          %s132 = smul.u32 128, %s131
          %p133 = scmp.lt.s32.totalorder %s128, 2
          %s134 = scalar_select %p133, %s128, 2
          %s135 = smul.addr %s134, 8
          %s136 = scalar_lea.vmem %s1, %s135
          %s137 = smul.u32 2, %s11
          %s138 = ssub.s32 3, %s137
          %p139 = scmp.lt.s32.totalorder %s138, 2
          %s140 = scalar_select %p139, %s138, 2
          %s141 = smul.u32 128, %s140
        $region24: #{tpu_custom_call.1} parent=15 // pred_fallthru
          _
      $region16: #{tpu_custom_call.1} parent=5 // pred_fallthru
        _
      %p142 = scmp.le.s32.totalorder 1, %s11
      %p143 = scmp.lt.s32.totalorder %s11, 3
      %p144 = pnand %p142, %p143
      %p145 = pneg %p144
      // Predicated region
      $region25: #{tpu_custom_call.1} parent=5 // pred_check
        _
      $region26: #{tpu_custom_call.1} parent=5 // pred_check_branch
        %147 = sbr.rel (%p144) target = $region28
      $region27: #{tpu_custom_call.1} parent=5 // pred_region
        %s148 = ssub.s32 %s11, 1
        %s149 = smul.u32 2, %s16
        %s150 = ssub.s32 3, %s149
        %p151 = scmp.lt.s32.totalorder %s150, 2
        %s152 = scalar_select %p151, %s150, 2
        %s153 = smul.u32 128, %s152
        %p154 = scmp.lt.s32.totalorder %s149, 2
        %s155 = scalar_select %p154, %s149, 2
        %s156 = smul.addr %s155, 8
        %s157 = scalar_lea.vmem %s0, %s156
        %p158 = pneg %p37
        %p159 = pneg %p34
        %s160 = smul.u32 2, %s16
        %s161 = ssub.s32 3, %s160
        %p162 = scmp.lt.s32.totalorder %s161, 2
        %s163 = scalar_select %p162, %s161, 2
        %s164 = smul.u32 128, %s163
        %p165 = scmp.lt.s32.totalorder %s160, 2
        %s166 = scalar_select %p165, %s160, 2
        %s167 = smul.addr %s166, 8
        %s168 = scalar_lea.vmem %s1, %s167
        %p169 = pneg %p63
        %p170 = pneg %p60
        %p171 = pneg %p89
        %p172 = pneg %p86
        %s173 = sand.u32 %s76, 1
        %s174 = scalar_lea.sflag [#allocation3], %s173
        %s175 = sand.u32 %s76, 1
        %s176 = smul.addr %s175, 8
        %s177 = scalar_lea.vmem [#allocation2], %s176
        %s178 = smul.u32 2, %s16
        %s179 = ssub.s32 3, %s178
        %p180 = scmp.lt.s32.totalorder %s179, 2
        %s181 = scalar_select %p180, %s179, 2
        %s182 = smul.u32 128, %s181
        %p183 = scmp.lt.s32.totalorder %s178, 2
        %s184 = scalar_select %p183, %s178, 2
        %s185 = smul.addr %s184, 8
        %s186 = scalar_lea.vmem %s0, %s185
        %s187 = smul.u32 2, %s16
        %s188 = ssub.s32 3, %s187
        %p189 = scmp.lt.s32.totalorder %s188, 2
        %s190 = scalar_select %p189, %s188, 2
        %s191 = smul.u32 128, %s190
        %s192 = smul.u32 2, %s16
        %s193 = ssub.s32 3, %s192
        %p194 = scmp.lt.s32.totalorder %s193, 2
        %s195 = scalar_select %p194, %s193, 2
        %s196 = smul.u32 128, %s195
        %p197 = scmp.lt.s32.totalorder %s192, 2
        %s198 = scalar_select %p197, %s192, 2
        %s199 = smul.addr %s198, 8
        %s200 = scalar_lea.vmem %s1, %s199
        %s201 = smul.u32 2, %s16
        %s202 = ssub.s32 3, %s201
        %p203 = scmp.lt.s32.totalorder %s202, 2
        %s204 = scalar_select %p203, %s202, 2
        %s205 = smul.u32 128, %s204
        %v206 = vld [vmem:[%s186] sm:$0xff]
        %v207 = vld [vmem:[%s186 + $0x8] sm:$0xff]
        %vm208 = vcmask 392192
        %v209 = vsel %vm208, %v206, -inf
        %210 = vmax.xlane.f32.xlu0 %v209
        %v211 = vpop.xlane.xlu0 %210
        %v212 = vsel %vm208, %v207, -inf
        %213 = vmax.xlane.f32.xlu0 %v212
        %v214 = vpop.xlane.xlu0 %213
        %v215 = vsub.f32 %v206, %v211
        %v216 = vsub.f32 %v207, %v214
        %v217 = vmul.f32 %v215, 1.442695
        %v218 = vpow.pop %v217
        %v219 = vmul.f32 %v216, 1.442695
        %v220 = vpow.pop %v219
        %v221 = vsel %vm208, %v218, 0.0
        %222 = vadd.xlane.f32.xlu0 %v221
        %v223 = vpop.xlane.xlu0 %222
        %v224 = vsel %vm208, %v220, 0.0
        %225 = vadd.xlane.f32.xlu0 %v224
        %v226 = vpop.xlane.xlu0 %225
        %v227 = vlog2.pop %v223
        %v228 = vmul.f32 %v227, 0.6931472
        %v229 = vlog2.pop %v226
        %v230 = vmul.f32 %v229, 0.6931472
        %v231 = vsel %vm208, %v215, 0.0
        %232 = vadd.xlane.f32.xlu0 %v231
        %v233 = vpop.xlane.xlu0 %232
        %v234 = vsel %vm208, %v216, 0.0
        %235 = vadd.xlane.f32.xlu0 %v234
        %v236 = vpop.xlane.xlu0 %235
        %v237 = vld [vmem:[%s200] sm:$0xff]
        %v238 = vld [vmem:[%s200 + $0x8] sm:$0xff]
        %v239 = vlaneseq
        %v240 = vand.u32 %v239, 127
        %241 = vset.pattern.permute.xlu0 0
        %242 = vperm.xlu0 %241, %v237
        %v243 = vpop.permute.xlu0 %242
        %244 = vset.pattern.permute.xlu0 0
        %245 = vperm.xlu0 %244, %v238
        %v246 = vpop.permute.xlu0 %245
        %vm247 = vcmp.eq.s32.totalorder %v240, %v243
        %vm248 = vcmp.eq.s32.totalorder %v240, %v246
        %v249 = vsel %vm247, %v215, 0.0
        %v250 = vsel %vm248, %v216, 0.0
        %v251 = vsel %vm208, %v249, 0.0
        %252 = vadd.xlane.f32.xlu0 %v251
        %v253 = vpop.xlane.xlu0 %252
        %v254 = vsel %vm208, %v250, 0.0
        %255 = vadd.xlane.f32.xlu0 %v254
        %v256 = vpop.xlane.xlu0 %255
        %v257 = vmul.f32 %v228, 48.0
        %v258 = vmul.f32 %v230, 48.0
        %v259 = vsub.f32 %v257, %v233
        %v260 = vsub.f32 %v258, %v236
        %v261 = vmul.f32 %v259, 0.0021276595
        %v262 = vmul.f32 %v260, 0.0021276595
        %v263 = vsub.f32 %v228, %v253
        %v264 = vsub.f32 %v230, %v256
        %v265 = vmul.f32 %v263, 0.8978723
        %v266 = vmul.f32 %v264, 0.8978723
        %v267 = vadd.f32 %v261, %v265
        %v268 = vadd.f32 %v262, %v266
        %s269 = smul.u32 %s16, 16
        %v270 = vlaneseq
        %v271 = vshrl.u32 %v270, 7
        %v272 = vadd.s32 %v271, 8
        %v273 = vstv %s269
        %v274 = vadd.s32 %v273, %v271
        %v275 = vadd.s32 %v273, %v272
        %vm276 = vcmp.lt.s32.totalorder %v274, 24
        %vm277 = vcmp.lt.s32.totalorder %v275, 24
        %v278 = vsel %vm276, %v267, 0.0
        %v279 = vsel %vm277, %v268, 0.0
        %vm280 = vcmask 7168
        %v281 = vsel %vm280, %v278, 0.0
        %v282 = vsel %vm280, %v279, 0.0
        %v283 = vadd.f32 %v281, %v282
        %284 = vadd.xlane.f32.xlu0 %v283
        %v285 = vpop.xlane.xlu0 %284
        %v286 = vrot.slane %v285, 4
        %v287 = vadd.f32 %v285, %v286
        %v288 = vrot.slane %v287, 2
        %v289 = vadd.f32 %v287, %v288
        %v290 = vrot.slane %v289, 1
        %v291 = vadd.f32 %v289, %v290
        %s292 = vtos %v291
        %v293 = vstv %s292
        %294 = vst [vmem:[%s177] sm:$0xff] %v293
        %s295 = sand.u32 %s76, 1
        %s296 = scalar_lea.sflag [#allocation3], %s295
        %s297 = sand.u32 %s76, 1
        %s298 = smul.addr %s297, 8
        %s299 = scalar_lea.vmem [#allocation2], %s298
        // Predicated region
        $region29: #{tpu_custom_call.1} parent=27 // pred_check
          %p300 = pneg %p86
        $region30: #{tpu_custom_call.1} parent=27 // pred_check_branch
          %302 = sbr.rel (%p300) target = $region32
        $region31: #{tpu_custom_call.1} parent=27 // pred_region
          %s304 = ssub.s32 128, 128
          %305 = vsyncadd %s296, %s304
          %s306 = smul.addr %s16, 128
          %s307 = scalar_lea.hbm %s2, %s306
          %s309 = sshll.u32 %s299, 4
          %s310 = int_to_ptr.vmem [resolvable:$true] %s309
          %312 = dma.vmem_to_hbm [thread:$0]  %s310, 128, %s307, %s296
        $region32: #{tpu_custom_call.1} parent=27 // pred_fallthru
          _
      $region28: #{tpu_custom_call.1} parent=5 // pred_fallthru
        _
      %p313 = scmp.le.s32.totalorder 2, %s11
      // Predicated region
      $region33: #{tpu_custom_call.1} parent=5 // pred_check
        %p314 = pneg %p313
      $region34: #{tpu_custom_call.1} parent=5 // pred_check_branch
        %316 = sbr.rel (%p314) target = $region36
      $region35: #{tpu_custom_call.1} parent=5 // pred_region
        %s317 = ssub.s32 %s11, 2
        // Predicated region
        $region37: #{tpu_custom_call.1} parent=35 // pred_check
          %p318 = pneg %p92
        $region38: #{tpu_custom_call.1} parent=35 // pred_check_branch
          %320 = sbr.rel (%p318) target = $region40
        $region39: #{tpu_custom_call.1} parent=35 // pred_region
          %s321 = sand.u32 %s77, 1
          %s322 = scalar_lea.sflag [#allocation3], %s321
          %s323 = sand.u32 %s77, 1
          %s324 = smul.addr %s323, 8
          %s325 = scalar_lea.vmem [#allocation2], %s324
          %326 = dma.done %s322, 128
        $region40: #{tpu_custom_call.1} parent=35 // pred_fallthru
          _
      $region36: #{tpu_custom_call.1} parent=5 // pred_fallthru
        _
    $region6: #{tpu_custom_call.1} parent=1 // loop_footer
      %s15 = sadd.s32 1, %s11
    $region7: #{tpu_custom_call.1} parent=1 // loop_footer_branch
      %10 = sbr.rel target = $region3
    $region8: #{tpu_custom_call.1} parent=1 // loop_exit
      _
    %327 = vsyncpa [#allocation3], 1
    %s328 = scalar_lea.sflag [#allocation3], 1
    %329 = vsyncpa %s328, 1

</llo_original>
